<compile_context>
chip_gen: v7x
topology: tpu7x:2x2x1
jax: 0.10.0
libtpu: 0.0.40
codegen_flags: <defaults>
</compile_context>

<pallas_src>
import functools

import jax
import jax.numpy as jnp
import numpy as np
from jax import lax
from jax.experimental import pallas as pl
from jax.experimental.pallas import tpu as pltpu

D_IN, H1, H2, D_OUT = 2, 100, 30, 3
LANE = 128


def _round_up(x, m):
    return pl.cdiv(x, m) * m


def mlp_kernel(x_ref, w1_ref, b1_ref, w2_ref, b2_ref, w3_ref, b3_ref, o_ref,
               *, chunk):
    """Fused 3-layer MLP forward for one batch tile; batch on the lane axis.

      x_ref : (D_IN,  tile)  dot dtype (bf16 default / f32)
      wN    : (out, in)      dot dtype   (PyTorch layout, VMEM-resident)
      bN    : (out, 1)       f32         (broadcasts over lanes)
      o_ref : (D_OUT, tile)  f32

    The tile is processed in `chunk`-lane slices so the (H1,chunk)/(H2,chunk)
    intermediates (and their bf16 cast copies) live in vregs rather than being
    stored/reloaded through VMEM between each dot and the bias/ReLU.
    """
    w1 = w1_ref[...]; b1 = b1_ref[...]
    w2 = w2_ref[...]; b2 = b2_ref[...]
    w3 = w3_ref[...]; b3 = b3_ref[...]
    n_chunks = x_ref.shape[-1] // chunk          # static

    def body(c, carry):
        start = pl.multiple_of(c * chunk, LANE)
        x = x_ref[:, pl.ds(start, chunk)]                         # (D_IN, chunk)
        h = jnp.dot(w1, x, preferred_element_type=jnp.float32) + b1
        h = jnp.maximum(h, 0.0)                                   # (H1, chunk)
        h = jnp.dot(w2, h.astype(w2.dtype),
                    preferred_element_type=jnp.float32) + b2
        h = jnp.maximum(h, 0.0)                                   # (H2, chunk)
        y = jnp.dot(w3, h.astype(w3.dtype),
                    preferred_element_type=jnp.float32) + b3      # (D_OUT, chunk)
        o_ref[:, pl.ds(start, chunk)] = y.astype(o_ref.dtype)
        return carry

    lax.fori_loop(0, n_chunks, body, 0, unroll=True)


def _force_two_steps():
    """Force >=2 grid steps only on chips where the 'parallel' grid axis can
    shard across TensorCores (megacore v4/v5p, dual-TC v7x).  On single-TC
    v5e/v6e the grid is a serial loop and the extra step is pure padding."""
    try:
        kind = jax.devices()[0].device_kind.lower()
    except Exception:
        return False
    return any(tag in kind for tag in ("v4", "v5p", "v7"))


def _choose_tiling(n, max_batch_tile, chunk):
    """Pick (n_pad, tile, chunk, steps): tile derived from N, chunk | tile."""
    n_lanes = _round_up(max(n, 1), LANE)
    min_steps = 2 if (_force_two_steps() and n_lanes >= 2 * LANE) else 1
    steps = max(pl.cdiv(n_lanes, max_batch_tile), min_steps)
    tile = pl.cdiv(n_lanes, steps)
    if tile <= chunk:
        tile = _round_up(tile, LANE)
        chunk = tile                      # single in-kernel chunk
    else:
        tile = _round_up(tile, chunk)     # chunk must divide the tile
    return steps * tile, tile, chunk, steps


def mlp_forward_t(xt, params, *, max_batch_tile=8192, chunk=512,
                  dot_dtype=jnp.bfloat16):
    """Transposed-layout entry point: xt is (D_IN, N) -> (D_OUT, N) f32.

    Prefer this when the surrounding program can produce/consume the
    batch-on-lanes layout: it avoids the two XLA HBM transposes that the
    PyTorch-style (N, D_IN) interface needs.
    """
    w1, b1, w2, b2, w3, b3 = params       # weights (out,in), biases (out,1)
    n = xt.shape[1]
    n_pad, tile, chunk, steps = _choose_tiling(n, max_batch_tile, chunk)

    xt = xt.astype(dot_dtype)
    if n_pad != n:
        xt = jnp.pad(xt, ((0, 0), (0, n_pad - n)))
    w1c, w2c, w3c = (w.astype(dot_dtype) for w in (w1, w2, w3))
    # biases stay f32: bias add / ReLU run in f32 on the VPU on all generations

    def resident(shape):
        # Tiny weights/biases (<60 KB total): one full block, constant
        # index_map keeps them resident in VMEM across all grid steps.
        return pl.BlockSpec(shape, lambda i: (0, 0))

    out_t = pl.pallas_call(
        functools.partial(mlp_kernel, chunk=chunk),
        out_shape=jax.ShapeDtypeStruct((D_OUT, n_pad), jnp.float32),
        grid_spec=pltpu.PrefetchScalarGridSpec(
            num_scalar_prefetch=0,
            grid=(steps,),
            in_specs=[
                pl.BlockSpec((D_IN, tile), lambda i: (0, i)),   # streamed x
                resident((H1, D_IN)),  resident((H1, 1)),       # w1, b1
                resident((H2, H1)),    resident((H2, 1)),       # w2, b2
                resident((D_OUT, H2)), resident((D_OUT, 1)),    # w3, b3
            ],
            out_specs=pl.BlockSpec((D_OUT, tile), lambda i: (0, i)),
        ),
        compiler_params=pltpu.CompilerParams(
            dimension_semantics=("parallel",),
        ),
    )(xt, w1c, b1, w2c, b2, w3c, b3)

    if n_pad != n:
        out_t = out_t[:, :n]
    return out_t


def mlp_forward(x, params, *, max_batch_tile=8192, chunk=512,
                dot_dtype=jnp.bfloat16):
    """PyTorch-style interface: x (N, D_IN) -> (N, D_OUT) f32.

    The two transposes here are HBM round trips; use mlp_forward_t directly
    when the caller can keep the batch-on-lanes layout.
    """
    out_t = mlp_forward_t(jnp.transpose(x), params,
                          max_batch_tile=max_batch_tile, chunk=chunk,
                          dot_dtype=dot_dtype)
    return jnp.transpose(out_t)


def init_params(key):
    """Deterministic init mimicking PyTorch's default Linear init
    (uniform(-1/sqrt(fan_in), 1/sqrt(fan_in))).
    Weights stored PyTorch-style as (out, in); biases as (out, 1)."""
    ks = jax.random.split(key, 6)

    def linear(kw, kb, fan_in, fan_out):
        bound = 1.0 / np.sqrt(fan_in)
        w = jax.random.uniform(kw, (fan_out, fan_in), jnp.float32, -bound, bound)
        b = jax.random.uniform(kb, (fan_out, 1), jnp.float32, -bound, bound)
        return w, b

    w1, b1 = linear(ks[0], ks[1], D_IN, H1)
    w2, b2 = linear(ks[2], ks[3], H1, H2)
    w3, b3 = linear(ks[4], ks[5], H2, D_OUT)
    return (w1, b1, w2, b2, w3, b3)


def mlp_reference(x, params):
    w1, b1, w2, b2, w3, b3 = params
    h = jnp.maximum(x @ w1.T + b1.T, 0.0)
    h = jnp.maximum(h @ w2.T + b2.T, 0.0)
    return h @ w3.T + b3.T


if __name__ == "__main__":
    key = jax.random.PRNGKey(0)
    k_params, k_x, k_big = jax.random.split(key, 3)

    params = init_params(k_params)

    # Small batch of 2-D "spiral" points: (16, 2) — strict f32-operand check.
    x = jax.random.normal(k_x, (16, D_IN), dtype=jnp.float32)
    ref = jax.block_until_ready(mlp_reference(x, params))
    out = jax.block_until_ready(mlp_forward(x, params, dot_dtype=jnp.float32))
    assert out.shape == (16, D_OUT)
    np.testing.assert_allclose(np.asarray(out), np.asarray(ref),
                               rtol=1e-5, atol=1e-5)

    # Default bf16-operand path (MXU-native on v5e/v6e/v7x; f32 accumulate).
    out_bf16 = jax.block_until_ready(mlp_forward(x, params))
    np.testing.assert_allclose(np.asarray(out_bf16), np.asarray(ref),
                               rtol=5e-2, atol=5e-2)

    # Larger ragged batch: exercises padding, multi-chunk tiles and multiple
    # grid steps (max_batch_tile=512 forces >1 step even for N=1000).
    x_big = jax.random.normal(k_big, (1000, D_IN), dtype=jnp.float32)
    ref_big = jax.block_until_ready(mlp_reference(x_big, params))
    out_big = jax.block_until_ready(
        mlp_forward(x_big, params, max_batch_tile=512))
    assert out_big.shape == (1000, D_OUT)
    np.testing.assert_allclose(np.asarray(out_big), np.asarray(ref_big),
                               rtol=5e-2, atol=5e-2)

    print("KERNEL_OK")
</pallas_src>

<mosaic_0001>
module attributes {stable_mosaic.version = 11 : i64} {
  func.func @mlp_kernel(%arg0: i32, %arg1: memref<2x128xf32, #tpu.memory_space<vmem>>, %arg2: memref<100x2xf32, #tpu.memory_space<vmem>>, %arg3: memref<100x1xf32, #tpu.memory_space<vmem>>, %arg4: memref<30x100xf32, #tpu.memory_space<vmem>>, %arg5: memref<30x1xf32, #tpu.memory_space<vmem>>, %arg6: memref<3x30xf32, #tpu.memory_space<vmem>>, %arg7: memref<3x1xf32, #tpu.memory_space<vmem>>, %arg8: memref<3x128xf32, #tpu.memory_space<vmem>>) attributes {dimension_semantics = [#tpu.dimension_semantics<parallel>], iteration_bounds = array<i64: 1>, scalar_prefetch = 0 : i64, scratch_operands = 0 : i64, tpu.core_type = #tpu.core_type<tc>, window_params = [{transform_indices = @transform_0, window_bounds = array<i64: 2, 128>}, {pipeline_mode = #tpu.pipeline_mode<synchronous>, transform_indices = @transform_1, window_bounds = array<i64: 100, 2>}, {pipeline_mode = #tpu.pipeline_mode<synchronous>, transform_indices = @transform_2, window_bounds = array<i64: 100, 1>}, {pipeline_mode = #tpu.pipeline_mode<synchronous>, transform_indices = @transform_3, window_bounds = array<i64: 30, 100>}, {pipeline_mode = #tpu.pipeline_mode<synchronous>, transform_indices = @transform_4, window_bounds = array<i64: 30, 1>}, {pipeline_mode = #tpu.pipeline_mode<synchronous>, transform_indices = @transform_5, window_bounds = array<i64: 3, 30>}, {pipeline_mode = #tpu.pipeline_mode<synchronous>, transform_indices = @transform_6, window_bounds = array<i64: 3, 1>}, {transform_indices = @transform_7, window_bounds = array<i64: 3, 128>}]} {
    %c0 = arith.constant 0 : index
    %c0_0 = arith.constant 0 : index
    %0 = vector.load %arg2[%c0, %c0_0] : memref<100x2xf32, #tpu.memory_space<vmem>>, vector<100x2xf32>
    %c0_1 = arith.constant 0 : index
    %c0_2 = arith.constant 0 : index
    %1 = vector.load %arg3[%c0_1, %c0_2] : memref<100x1xf32, #tpu.memory_space<vmem>>, vector<100x1xf32>
    %c0_3 = arith.constant 0 : index
    %c0_4 = arith.constant 0 : index
    %2 = vector.load %arg4[%c0_3, %c0_4] : memref<30x100xf32, #tpu.memory_space<vmem>>, vector<30x100xf32>
    %c0_5 = arith.constant 0 : index
    %c0_6 = arith.constant 0 : index
    %3 = vector.load %arg5[%c0_5, %c0_6] : memref<30x1xf32, #tpu.memory_space<vmem>>, vector<30x1xf32>
    %c0_7 = arith.constant 0 : index
    %c0_8 = arith.constant 0 : index
    %4 = vector.load %arg6[%c0_7, %c0_8] : memref<3x30xf32, #tpu.memory_space<vmem>>, vector<3x30xf32>
    %c0_9 = arith.constant 0 : index
    %c0_10 = arith.constant 0 : index
    %5 = vector.load %arg7[%c0_9, %c0_10] : memref<3x1xf32, #tpu.memory_space<vmem>>, vector<3x1xf32>
    %c0_i32 = arith.constant 0 : i32
    %c128_i32 = arith.constant 128 : i32
    %6 = arith.muli %c0_i32, %c128_i32 : i32
    %7 = tpu.assume_multiple %6, 128 : i32
    %c0_11 = arith.constant 0 : index
    %8 = arith.index_cast %7 : i32 to index
    %9 = vector.load %arg1[%c0_11, %8] : memref<2x128xf32, #tpu.memory_space<vmem>>, vector<2x128xf32>
    %cst = arith.constant dense<0.000000e+00> : vector<100x128xf32>
    %10 = tpu.matmul %0, %9, %cst {dimension_numbers = #tpu.dot_dimension_numbers<[1], [0], [0], [1], [0, 0, 1, 1], [], []>} : vector<100x2xf32>, vector<2x128xf32>, vector<100x128xf32> -> vector<100x128xf32>
    %11 = vector.broadcast %1 : vector<100x1xf32> to vector<100x128xf32>
    %12 = arith.addf %10, %11 : vector<100x128xf32>
    %cst_12 = arith.constant 0.000000e+00 : f32
    %13 = vector.broadcast %cst_12 : f32 to vector<100x128xf32>
    %14 = arith.maximumf %12, %13 : vector<100x128xf32>
    %cst_13 = arith.constant dense<0.000000e+00> : vector<30x128xf32>
    %15 = tpu.matmul %2, %14, %cst_13 {dimension_numbers = #tpu.dot_dimension_numbers<[1], [0], [0], [1], [0, 0, 1, 1], [], []>} : vector<30x100xf32>, vector<100x128xf32>, vector<30x128xf32> -> vector<30x128xf32>
    %16 = vector.broadcast %3 : vector<30x1xf32> to vector<30x128xf32>
    %17 = arith.addf %15, %16 : vector<30x128xf32>
    %cst_14 = arith.constant 0.000000e+00 : f32
    %18 = vector.broadcast %cst_14 : f32 to vector<30x128xf32>
    %19 = arith.maximumf %17, %18 : vector<30x128xf32>
    %cst_15 = arith.constant dense<0.000000e+00> : vector<3x128xf32>
    %20 = tpu.matmul %4, %19, %cst_15 {dimension_numbers = #tpu.dot_dimension_numbers<[1], [0], [0], [1], [0, 0, 1, 1], [], []>} : vector<3x30xf32>, vector<30x128xf32>, vector<3x128xf32> -> vector<3x128xf32>
    %21 = vector.broadcast %5 : vector<3x1xf32> to vector<3x128xf32>
    %22 = arith.addf %20, %21 : vector<3x128xf32>
    %c0_16 = arith.constant 0 : index
    %23 = arith.index_cast %7 : i32 to index
    %24 = vector.load %arg8[%c0_16, %23] : memref<3x128xf32, #tpu.memory_space<vmem>>, vector<3x128xf32>
    tpu.vector_store %arg8[%c0_16, %23], %22 {strides = array<i32>} : memref<3x128xf32, #tpu.memory_space<vmem>>, vector<3x128xf32>,
    %c1_i32 = arith.constant 1 : i32
    return
  }
  func.func @transform_0(%arg0: i32) -> (i32, i32) {
    %c0_i32 = arith.constant 0 : i32
    %c0_i32_0 = arith.constant 0 : i32
    return %c0_i32, %arg0 : i32, i32
  }
  func.func @transform_1(%arg0: i32) -> (i32, i32) {
    %c0_i32 = arith.constant 0 : i32
    %c0_i32_0 = arith.constant 0 : i32
    %c0_i32_1 = arith.constant 0 : i32
    return %c0_i32, %c0_i32_0 : i32, i32
  }
  func.func @transform_2(%arg0: i32) -> (i32, i32) {
    %c0_i32 = arith.constant 0 : i32
    %c0_i32_0 = arith.constant 0 : i32
    %c0_i32_1 = arith.constant 0 : i32
    return %c0_i32, %c0_i32_0 : i32, i32
  }
  func.func @transform_3(%arg0: i32) -> (i32, i32) {
    %c0_i32 = arith.constant 0 : i32
    %c0_i32_0 = arith.constant 0 : i32
    %c0_i32_1 = arith.constant 0 : i32
    return %c0_i32, %c0_i32_0 : i32, i32
  }
  func.func @transform_4(%arg0: i32) -> (i32, i32) {
    %c0_i32 = arith.constant 0 : i32
    %c0_i32_0 = arith.constant 0 : i32
    %c0_i32_1 = arith.constant 0 : i32
    return %c0_i32, %c0_i32_0 : i32, i32
  }
  func.func @transform_5(%arg0: i32) -> (i32, i32) {
    %c0_i32 = arith.constant 0 : i32
    %c0_i32_0 = arith.constant 0 : i32
    %c0_i32_1 = arith.constant 0 : i32
    return %c0_i32, %c0_i32_0 : i32, i32
  }
  func.func @transform_6(%arg0: i32) -> (i32, i32) {
    %c0_i32 = arith.constant 0 : i32
    %c0_i32_0 = arith.constant 0 : i32
    %c0_i32_1 = arith.constant 0 : i32
    return %c0_i32, %c0_i32_0 : i32, i32
  }
  func.func @transform_7(%arg0: i32) -> (i32, i32) {
    %c0_i32 = arith.constant 0 : i32
    %c0_i32_0 = arith.constant 0 : i32
    return %c0_i32, %arg0 : i32, i32
  }
}

</mosaic_0001>

<llo_original>
// kernel: tpu_custom_call.1
$region0: #{tpu_custom_call.1}
  #allocation0 [shape = 'u32[]', space=smem, size = 0x4, offset = 0x4, fixed_abs, tag = 'smem constant byte address 0x4 - core index']
  #allocation1 [shape = 'u32[144,128]{1,0:T(1,128)}', space=vmem, size = 0x12000, scoped, tag = 'internal scratch']
  %s0 = inlined_call_operand.vmem [shape: f32[2,128], index: 0, kind: input, shape index: {}]
  %s1 = inlined_call_operand.vmem [shape: f32[100,2], index: 1, kind: input, shape index: {}]
  %s2 = inlined_call_operand.vmem [shape: f32[100,1], index: 2, kind: input, shape index: {}]
  %s3 = inlined_call_operand.vmem [shape: f32[30,100], index: 3, kind: input, shape index: {}]
  %s4 = inlined_call_operand.vmem [shape: f32[30,1], index: 4, kind: input, shape index: {}]
  %s5 = inlined_call_operand.vmem [shape: f32[3,30], index: 5, kind: input, shape index: {}]
  %s6 = inlined_call_operand.vmem [shape: f32[3,1], index: 6, kind: input, shape index: {}]
  %s7 = inlined_call_operand.hbm [shape: f32[3,128], index: 7, kind: output, shape index: {}]
  %s8 = sld [smem:[#allocation0]]
  $region38: #{tpu_custom_call.1} parent=0
    _
  %s10 = ssub.s32 1, %s8
  %s11 = scalar_select 0, %s10, %s8
  $region1: #{tpu_custom_call.1} parent=0
    #allocation2 [shape = 'u8[2048]{0}', space=vmem, size = 0x800, scoped, tag = 'output window, operand 0, single buffered']
    #allocation3 [shape = 's32[1]{0}', space=sflag, size = 0x4, scoped, tag = 'scoped memory for tpu_custom_call.1']
    %12 = vsyncpa [#allocation3], 0
    // Predicated region
    $region2: #{tpu_custom_call.1} parent=1 // pred_check
      _
    $region3: #{tpu_custom_call.1} parent=1 // pred_check_branch
      %14 = sbr.rel (0) target = $region5
    $region4: #{tpu_custom_call.1} parent=1 // pred_region
      _
    $region5: #{tpu_custom_call.1} parent=1 // pred_fallthru
      _
    // Predicated region
    $region6: #{tpu_custom_call.1} parent=1 // pred_check
      _
    $region7: #{tpu_custom_call.1} parent=1 // pred_check_branch
      %16 = sbr.rel (0) target = $region9
    $region8: #{tpu_custom_call.1} parent=1 // pred_region
      _
    $region9: #{tpu_custom_call.1} parent=1 // pred_fallthru
      _
    // Predicated region
    $region10: #{tpu_custom_call.1} parent=1 // pred_check
      _
    $region11: #{tpu_custom_call.1} parent=1 // pred_check_branch
      %18 = sbr.rel (0) target = $region13
    $region12: #{tpu_custom_call.1} parent=1 // pred_region
      _
    $region13: #{tpu_custom_call.1} parent=1 // pred_fallthru
      _
    // Predicated region
    $region14: #{tpu_custom_call.1} parent=1 // pred_check
      _
    $region15: #{tpu_custom_call.1} parent=1 // pred_check_branch
      %20 = sbr.rel (0) target = $region17
    $region16: #{tpu_custom_call.1} parent=1 // pred_region
      _
    $region17: #{tpu_custom_call.1} parent=1 // pred_fallthru
      _
    // Predicated region
    $region18: #{tpu_custom_call.1} parent=1 // pred_check
      _
    $region19: #{tpu_custom_call.1} parent=1 // pred_check_branch
      %22 = sbr.rel (0) target = $region21
    $region20: #{tpu_custom_call.1} parent=1 // pred_region
      _
    $region21: #{tpu_custom_call.1} parent=1 // pred_fallthru
      _
    // Predicated region
    $region22: #{tpu_custom_call.1} parent=1 // pred_check
      _
    $region23: #{tpu_custom_call.1} parent=1 // pred_check_branch
      %24 = sbr.rel (0) target = $region25
    $region24: #{tpu_custom_call.1} parent=1 // pred_region
      _
    $region25: #{tpu_custom_call.1} parent=1 // pred_fallthru
      _
    // Predicated region
    $region26: #{tpu_custom_call.1} parent=1 // pred_check
      _
    $region27: #{tpu_custom_call.1} parent=1 // pred_check_branch
      %26 = sbr.rel (0) target = $region29
    $region28: #{tpu_custom_call.1} parent=1 // pred_region
      _
    $region29: #{tpu_custom_call.1} parent=1 // pred_fallthru
      _
    %v27 = vld [vmem:[%s1] sm:$0xff]
    %v28 = vld [vmem:[%s1 + $0x8] sm:$0xff]
    %v29 = vld [vmem:[%s1 + $0x10] sm:$0xff]
    %v30 = vld [vmem:[%s1 + $0x18] sm:$0xff]
    %v31 = vld [vmem:[%s1 + $0x20] sm:$0xff]
    %v32 = vld [vmem:[%s1 + $0x28] sm:$0xff]
    %v33 = vld [vmem:[%s1 + $0x30] sm:$0xff]
    %v34 = vld [vmem:[%s1 + $0x38] sm:$0xff]
    %v35 = vld [vmem:[%s1 + $0x40] sm:$0xff]
    %v36 = vld [vmem:[%s1 + $0x48] sm:$0xff]
    %v37 = vld [vmem:[%s1 + $0x50] sm:$0xff]
    %v38 = vld [vmem:[%s1 + $0x58] sm:$0xff]
    %v39 = vld [vmem:[%s1 + $0x60] sm:$0xf]
    %v40 = vld [vmem:[%s2] sm:$0xff]
    %v41 = vld [vmem:[%s2 + $0x8] sm:$0xff]
    %v42 = vld [vmem:[%s2 + $0x10] sm:$0xff]
    %v43 = vld [vmem:[%s2 + $0x18] sm:$0xff]
    %v44 = vld [vmem:[%s2 + $0x20] sm:$0xff]
    %v45 = vld [vmem:[%s2 + $0x28] sm:$0xff]
    %v46 = vld [vmem:[%s2 + $0x30] sm:$0xff]
    %v47 = vld [vmem:[%s2 + $0x38] sm:$0xff]
    %v48 = vld [vmem:[%s2 + $0x40] sm:$0xff]
    %v49 = vld [vmem:[%s2 + $0x48] sm:$0xff]
    %v50 = vld [vmem:[%s2 + $0x50] sm:$0xff]
    %v51 = vld [vmem:[%s2 + $0x58] sm:$0xff]
    %v52 = vld [vmem:[%s2 + $0x60] sm:$0xf]
    %v53 = vld [vmem:[%s3] sm:$0xff]
    %v54 = vld [vmem:[%s3 + $0x8] sm:$0xff]
    %v55 = vld [vmem:[%s3 + $0x10] sm:$0xff]
    %v56 = vld [vmem:[%s3 + $0x18] sm:$0x3f]
    %v57 = vld [vmem:[%s4] sm:$0xff]
    %v58 = vld [vmem:[%s4 + $0x8] sm:$0xff]
    %v59 = vld [vmem:[%s4 + $0x10] sm:$0xff]
    %v60 = vld [vmem:[%s4 + $0x18] sm:$0x3f]
    %v61 = vld [vmem:[%s5] sm:$0x7]
    %v62 = vld [vmem:[%s6] sm:$0x7]
    %v63 = vld [vmem:[%s0] sm:$0x3]
    %65 = vset.pattern.permute.xlu0 0
    %66 = vperm.xlu0 %65, %v40
    %v67 = vpop.permute.xlu0 %66
    %70 = vset.pattern.permute.xlu0 0
    %71 = vperm.xlu0 %70, %v41
    %v72 = vpop.permute.xlu0 %71
    %75 = vset.pattern.permute.xlu0 0
    %76 = vperm.xlu0 %75, %v42
    %v77 = vpop.permute.xlu0 %76
    %80 = vset.pattern.permute.xlu0 0
    %81 = vperm.xlu0 %80, %v43
    %v82 = vpop.permute.xlu0 %81
    %85 = vset.pattern.permute.xlu0 0
    %86 = vperm.xlu0 %85, %v44
    %v87 = vpop.permute.xlu0 %86
    %90 = vset.pattern.permute.xlu0 0
    %91 = vperm.xlu0 %90, %v45
    %v92 = vpop.permute.xlu0 %91
    %95 = vset.pattern.permute.xlu0 0
    %96 = vperm.xlu0 %95, %v46
    %v97 = vpop.permute.xlu0 %96
    %100 = vset.pattern.permute.xlu0 0
    %101 = vperm.xlu0 %100, %v47
    %v102 = vpop.permute.xlu0 %101
    %105 = vset.pattern.permute.xlu0 0
    %106 = vperm.xlu0 %105, %v48
    %v107 = vpop.permute.xlu0 %106
    %110 = vset.pattern.permute.xlu0 0
    %111 = vperm.xlu0 %110, %v49
    %v112 = vpop.permute.xlu0 %111
    %115 = vset.pattern.permute.xlu0 0
    %116 = vperm.xlu0 %115, %v50
    %v117 = vpop.permute.xlu0 %116
    %120 = vset.pattern.permute.xlu0 0
    %121 = vperm.xlu0 %120, %v51
    %v122 = vpop.permute.xlu0 %121
    %125 = vset.pattern.permute.xlu0 0
    %126 = vperm.xlu0 %125, %v52
    %v127 = vpop.permute.xlu0 %126
    %vm129 = vcmask 15360
    %v131 = vsel %vm129, %v27, 0
    %v134 = vsel %vm129, %v28, 0
    %v137 = vsel %vm129, %v29, 0
    %v140 = vsel %vm129, %v30, 0
    %v143 = vsel %vm129, %v31, 0
    %v146 = vsel %vm129, %v32, 0
    %v149 = vsel %vm129, %v33, 0
    %v152 = vsel %vm129, %v34, 0
    %v155 = vsel %vm129, %v35, 0
    %v158 = vsel %vm129, %v36, 0
    %v161 = vsel %vm129, %v37, 0
    %v164 = vsel %vm129, %v38, 0
    %v167 = vsel %vm129, %v39, 0
    %vm169 = vcmask 1041408
    %v171 = vsel %vm169, %v63, 0
    %173 = vmatprep.subr.mxu0 0.0
    %174 = vmatpush1.msra.mxu0 %v171
    %175 = vmatprep.subr.mxu0 0.0
    %176 = vmatpush1.msra.mxu0 0.0
    %177 = vmatprep.subr.mxu0 0.0
    %178 = vmatpush1.msra.mxu0 0.0
    %179 = vmatprep.subr.mxu0 0.0
    %180 = vmatpush1.msra.mxu0 0.0
    %181 = vmatprep.subr.mxu0 0.0
    %182 = vmatpush1.msra.mxu0 0.0
    %183 = vmatprep.subr.mxu0 0.0
    %184 = vmatpush1.msra.mxu0 0.0
    %185 = vmatprep.subr.mxu0 0.0
    %186 = vmatpush1.msra.mxu0 0.0
    %187 = vmatprep.subr.mxu0 0.0
    %188 = vmatpush1.msra.mxu0 0.0
    %189 = vmatprep.subr.mxu0 0.0
    %190 = vmatpush1.msra.mxu0 0.0
    %191 = vmatprep.subr.mxu0 0.0
    %192 = vmatpush1.msra.mxu0 0.0
    %193 = vmatprep.subr.mxu0 0.0
    %194 = vmatpush1.msra.mxu0 0.0
    %195 = vmatprep.subr.mxu0 0.0
    %196 = vmatpush1.msra.mxu0 0.0
    %197 = vmatprep.subr.mxu0 0.0
    %198 = vmatpush1.msra.mxu0 0.0
    %199 = vmatprep.subr.mxu0 0.0
    %200 = vmatpush1.msra.mxu0 0.0
    %201 = vmatprep.subr.mxu0 0.0
    %202 = vmatpush1.msra.mxu0 0.0
    %203 = vmatprep.subr.mxu0 0.0
    %204 = vmatpush1.msra.mxu0 0.0
    %205 = vmatprep.subr.mxu0 0.0
    %206 = vmatpush1.msra.mxu0 0.0
    %207 = vmatprep.subr.mxu0 0.0
    %208 = vmatpush1.msra.mxu0 0.0
    %209 = vmatprep.subr.mxu0 0.0
    %210 = vmatpush1.msra.mxu0 0.0
    %211 = vmatprep.subr.mxu0 0.0
    %212 = vmatpush1.msra.mxu0 0.0
    %213 = vmatprep.subr.mxu0 0.0
    %214 = vmatpush1.msra.mxu0 0.0
    %215 = vmatprep.subr.mxu0 0.0
    %216 = vmatpush1.msra.mxu0 0.0
    %217 = vmatprep.subr.mxu0 0.0
    %218 = vmatpush1.msra.mxu0 0.0
    %219 = vmatprep.subr.mxu0 0.0
    %220 = vmatpush1.msra.mxu0 0.0
    %221 = vmatprep.subr.mxu0 0.0
    %222 = vmatpush1.msra.mxu0 0.0
    %223 = vmatprep.subr.mxu0 0.0
    %224 = vmatpush1.msra.mxu0 0.0
    %225 = vmatprep.subr.mxu0 0.0
    %226 = vmatpush1.msra.mxu0 0.0
    %227 = vmatprep.subr.mxu0 0.0
    %228 = vmatpush1.msra.mxu0 0.0
    %229 = vmatprep.subr.mxu0 0.0
    %230 = vmatpush1.msra.mxu0 0.0
    %231 = vmatprep.subr.mxu0 0.0
    %232 = vmatpush1.msra.mxu0 0.0
    %233 = vmatprep.subr.mxu0 0.0
    %234 = vmatpush1.msra.mxu0 0.0
    %235 = vmatprep.subr.mxu0 0.0
    %236 = vmatpush1.msra.mxu0 0.0
    %237 = vmatprep.mubr.f32.mxu0 0.0
    %238 = vmatmul.mubr.f32.gmra.mrb[0].mxu0 %v131
    %v239 = vpop.f32.mrb[0].mxu0
    %v240 = vadd.f32 %v67, %v239
    %v241 = vpop.f32.mrb[0].mxu0
    %242 = vmatprep.mubr.f32.mxu0 0.0
    %243 = vmatmul.mubr.f32.gmra.mrb[0].mxu0 %v134
    %v244 = vpop.f32.mrb[0].mxu0
    %v245 = vadd.f32 %v72, %v244
    %v246 = vpop.f32.mrb[0].mxu0
    %247 = vmatprep.mubr.f32.mxu0 0.0
    %248 = vmatmul.mubr.f32.gmra.mrb[0].mxu0 %v137
    %v249 = vpop.f32.mrb[0].mxu0
    %v250 = vadd.f32 %v77, %v249
    %v251 = vpop.f32.mrb[0].mxu0
    %252 = vmatprep.mubr.f32.mxu0 0.0
    %253 = vmatmul.mubr.f32.gmra.mrb[0].mxu0 %v140
    %v254 = vpop.f32.mrb[0].mxu0
    %v255 = vadd.f32 %v82, %v254
    %v256 = vpop.f32.mrb[0].mxu0
    %257 = vmatprep.mubr.f32.mxu0 0.0
    %258 = vmatmul.mubr.f32.gmra.mrb[0].mxu0 %v143
    %v259 = vpop.f32.mrb[0].mxu0
    %v260 = vadd.f32 %v87, %v259
    %v261 = vpop.f32.mrb[0].mxu0
    %262 = vmatprep.mubr.f32.mxu0 0.0
    %263 = vmatmul.mubr.f32.gmra.mrb[0].mxu0 %v146
    %v264 = vpop.f32.mrb[0].mxu0
    %v265 = vadd.f32 %v92, %v264
    %v266 = vpop.f32.mrb[0].mxu0
    %267 = vmatprep.mubr.f32.mxu0 0.0
    %268 = vmatmul.mubr.f32.gmra.mrb[0].mxu0 %v149
    %v269 = vpop.f32.mrb[0].mxu0
    %v270 = vadd.f32 %v97, %v269
    %v271 = vpop.f32.mrb[0].mxu0
    %272 = vmatprep.mubr.f32.mxu0 0.0
    %273 = vmatmul.mubr.f32.gmra.mrb[0].mxu0 %v152
    %v274 = vpop.f32.mrb[0].mxu0
    %v275 = vadd.f32 %v102, %v274
    %v276 = vpop.f32.mrb[0].mxu0
    %277 = vmatprep.mubr.f32.mxu0 0.0
    %278 = vmatmul.mubr.f32.gmra.mrb[0].mxu0 %v155
    %v279 = vpop.f32.mrb[0].mxu0
    %v280 = vadd.f32 %v107, %v279
    %v281 = vpop.f32.mrb[0].mxu0
    %282 = vmatprep.mubr.f32.mxu0 0.0
    %283 = vmatmul.mubr.f32.gmra.mrb[0].mxu0 %v158
    %v284 = vpop.f32.mrb[0].mxu0
    %v285 = vadd.f32 %v112, %v284
    %v286 = vpop.f32.mrb[0].mxu0
    %287 = vmatprep.mubr.f32.mxu0 0.0
    %288 = vmatmul.mubr.f32.gmra.mrb[0].mxu0 %v161
    %v289 = vpop.f32.mrb[0].mxu0
    %v290 = vadd.f32 %v117, %v289
    %v291 = vpop.f32.mrb[0].mxu0
    %292 = vmatprep.mubr.f32.mxu0 0.0
    %293 = vmatmul.mubr.f32.gmra.mrb[0].mxu0 %v164
    %v294 = vpop.f32.mrb[0].mxu0
    %v295 = vadd.f32 %v122, %v294
    %v296 = vpop.f32.mrb[0].mxu0
    %297 = vmatprep.mubr.f32.mxu0 0.0
    %298 = vmatmul.mubr.f32.gmra.mrb[0].mxu0 %v167
    %v299 = vpop.f32.mrb[0].mxu0
    %v300 = vadd.f32 %v127, %v299
    %v301 = vpop.f32.mrb[0].mxu0
    %302 = vdwg.mxu0
    %v303 = vmax.f32 %v240, 0.0
    %v304 = vmax.f32 %v245, 0.0
    %v305 = vmax.f32 %v250, 0.0
    %v306 = vmax.f32 %v255, 0.0
    %v307 = vmax.f32 %v260, 0.0
    %v308 = vmax.f32 %v265, 0.0
    %v309 = vmax.f32 %v270, 0.0
    %v310 = vmax.f32 %v275, 0.0
    %v311 = vmax.f32 %v280, 0.0
    %v312 = vmax.f32 %v285, 0.0
    %v313 = vmax.f32 %v290, 0.0
    %v314 = vmax.f32 %v295, 0.0
    %v315 = vmax.f32 %v300, 0.0
    %317 = vset.pattern.permute.xlu0 0
    %318 = vperm.xlu0 %317, %v57
    %v319 = vpop.permute.xlu0 %318
    %322 = vset.pattern.permute.xlu0 0
    %323 = vperm.xlu0 %322, %v58
    %v324 = vpop.permute.xlu0 %323
    %327 = vset.pattern.permute.xlu0 0
    %328 = vperm.xlu0 %327, %v59
    %v329 = vpop.permute.xlu0 %328
    %332 = vset.pattern.permute.xlu0 0
    %333 = vperm.xlu0 %332, %v60
    %v334 = vpop.permute.xlu0 %333
    %vm336 = vcmask 818176
    %v338 = vsel %vm336, %v53, 0
    %v341 = vsel %vm336, %v54, 0
    %v344 = vsel %vm336, %v55, 0
    %v347 = vsel %vm336, %v56, 0
    %vm349 = vcmask 1043456
    %v351 = vsel %vm349, %v315, 0
    %353 = vmatprep.subr.mxu0 0.0
    %354 = vmatpush1.msra.mxu0 %v303
    %355 = vmatprep.subr.mxu0 0.0
    %356 = vmatpush1.msra.mxu0 %v304
    %357 = vmatprep.subr.mxu0 0.0
    %358 = vmatpush1.msra.mxu0 %v305
    %359 = vmatprep.subr.mxu0 0.0
    %360 = vmatpush1.msra.mxu0 %v306
    %361 = vmatprep.subr.mxu0 0.0
    %362 = vmatpush1.msra.mxu0 %v307
    %363 = vmatprep.subr.mxu0 0.0
    %364 = vmatpush1.msra.mxu0 %v308
    %365 = vmatprep.subr.mxu0 0.0
    %366 = vmatpush1.msra.mxu0 %v309
    %367 = vmatprep.subr.mxu0 0.0
    %368 = vmatpush1.msra.mxu0 %v310
    %369 = vmatprep.subr.mxu0 0.0
    %370 = vmatpush1.msra.mxu0 %v311
    %371 = vmatprep.subr.mxu0 0.0
    %372 = vmatpush1.msra.mxu0 %v312
    %373 = vmatprep.subr.mxu0 0.0
    %374 = vmatpush1.msra.mxu0 %v313
    %375 = vmatprep.subr.mxu0 0.0
    %376 = vmatpush1.msra.mxu0 %v314
    %377 = vmatprep.subr.mxu0 0.0
    %378 = vmatpush1.msra.mxu0 %v351
    %379 = vmatprep.subr.mxu0 0.0
    %380 = vmatpush1.msra.mxu0 0.0
    %381 = vmatprep.subr.mxu0 0.0
    %382 = vmatpush1.msra.mxu0 0.0
    %383 = vmatprep.subr.mxu0 0.0
    %384 = vmatpush1.msra.mxu0 0.0
    %385 = vmatprep.subr.mxu0 0.0
    %386 = vmatpush1.msra.mxu0 0.0
    %387 = vmatprep.subr.mxu0 0.0
    %388 = vmatpush1.msra.mxu0 0.0
    %389 = vmatprep.subr.mxu0 0.0
    %390 = vmatpush1.msra.mxu0 0.0
    %391 = vmatprep.subr.mxu0 0.0
    %392 = vmatpush1.msra.mxu0 0.0
    %393 = vmatprep.subr.mxu0 0.0
    %394 = vmatpush1.msra.mxu0 0.0
    %395 = vmatprep.subr.mxu0 0.0
    %396 = vmatpush1.msra.mxu0 0.0
    %397 = vmatprep.subr.mxu0 0.0
    %398 = vmatpush1.msra.mxu0 0.0
    %399 = vmatprep.subr.mxu0 0.0
    %400 = vmatpush1.msra.mxu0 0.0
    %401 = vmatprep.subr.mxu0 0.0
    %402 = vmatpush1.msra.mxu0 0.0
    %403 = vmatprep.subr.mxu0 0.0
    %404 = vmatpush1.msra.mxu0 0.0
    %405 = vmatprep.subr.mxu0 0.0
    %406 = vmatpush1.msra.mxu0 0.0
    %407 = vmatprep.subr.mxu0 0.0
    %408 = vmatpush1.msra.mxu0 0.0
    %409 = vmatprep.subr.mxu0 0.0
    %410 = vmatpush1.msra.mxu0 0.0
    %411 = vmatprep.subr.mxu0 0.0
    %412 = vmatpush1.msra.mxu0 0.0
    %413 = vmatprep.subr.mxu0 0.0
    %414 = vmatpush1.msra.mxu0 0.0
    %415 = vmatprep.subr.mxu0 0.0
    %416 = vmatpush1.msra.mxu0 0.0
    %417 = vmatprep.mubr.f32.mxu0 0.0
    %418 = vmatmul.mubr.f32.gmra.mrb[0].mxu0 %v338
    %v419 = vpop.f32.mrb[0].mxu0
    %v420 = vadd.f32 %v319, %v419
    %v421 = vpop.f32.mrb[0].mxu0
    %422 = vmatprep.mubr.f32.mxu0 0.0
    %423 = vmatmul.mubr.f32.gmra.mrb[0].mxu0 %v341
    %v424 = vpop.f32.mrb[0].mxu0
    %v425 = vadd.f32 %v324, %v424
    %v426 = vpop.f32.mrb[0].mxu0
    %427 = vmatprep.mubr.f32.mxu0 0.0
    %428 = vmatmul.mubr.f32.gmra.mrb[0].mxu0 %v344
    %v429 = vpop.f32.mrb[0].mxu0
    %v430 = vadd.f32 %v329, %v429
    %v431 = vpop.f32.mrb[0].mxu0
    %432 = vmatprep.mubr.f32.mxu0 0.0
    %433 = vmatmul.mubr.f32.gmra.mrb[0].mxu0 %v347
    %v434 = vpop.f32.mrb[0].mxu0
    %v435 = vadd.f32 %v334, %v434
    %v436 = vpop.f32.mrb[0].mxu0
    %437 = vdwg.mxu0
    %v438 = vmax.f32 %v420, 0.0
    %v439 = vmax.f32 %v425, 0.0
    %v440 = vmax.f32 %v430, 0.0
    %v441 = vmax.f32 %v435, 0.0
    %443 = vset.pattern.permute.xlu0 0
    %444 = vperm.xlu0 %443, %v62
    %v445 = vpop.permute.xlu0 %444
    %vm447 = vcmask 244736
    %v449 = vsel %vm447, %v61, 0
    %vm451 = vcmask 1045504
    %v453 = vsel %vm451, %v441, 0
    %455 = vmatprep.subr.mxu0 0.0
    %456 = vmatpush1.msra.mxu0 %v438
    %457 = vmatprep.subr.mxu0 0.0
    %458 = vmatpush1.msra.mxu0 %v439
    %459 = vmatprep.subr.mxu0 0.0
    %460 = vmatpush1.msra.mxu0 %v440
    %461 = vmatprep.subr.mxu0 0.0
    %462 = vmatpush1.msra.mxu0 %v453
    %463 = vmatprep.subr.mxu0 0.0
    %464 = vmatpush1.msra.mxu0 0.0
    %465 = vmatprep.subr.mxu0 0.0
    %466 = vmatpush1.msra.mxu0 0.0
    %467 = vmatprep.subr.mxu0 0.0
    %468 = vmatpush1.msra.mxu0 0.0
    %469 = vmatprep.subr.mxu0 0.0
    %470 = vmatpush1.msra.mxu0 0.0
    %471 = vmatprep.subr.mxu0 0.0
    %472 = vmatpush1.msra.mxu0 0.0
    %473 = vmatprep.subr.mxu0 0.0
    %474 = vmatpush1.msra.mxu0 0.0
    %475 = vmatprep.subr.mxu0 0.0
    %476 = vmatpush1.msra.mxu0 0.0
    %477 = vmatprep.subr.mxu0 0.0
    %478 = vmatpush1.msra.mxu0 0.0
    %479 = vmatprep.subr.mxu0 0.0
    %480 = vmatpush1.msra.mxu0 0.0
    %481 = vmatprep.subr.mxu0 0.0
    %482 = vmatpush1.msra.mxu0 0.0
    %483 = vmatprep.subr.mxu0 0.0
    %484 = vmatpush1.msra.mxu0 0.0
    %485 = vmatprep.subr.mxu0 0.0
    %486 = vmatpush1.msra.mxu0 0.0
    %487 = vmatprep.subr.mxu0 0.0
    %488 = vmatpush1.msra.mxu0 0.0
    %489 = vmatprep.subr.mxu0 0.0
    %490 = vmatpush1.msra.mxu0 0.0
    %491 = vmatprep.subr.mxu0 0.0
    %492 = vmatpush1.msra.mxu0 0.0
    %493 = vmatprep.subr.mxu0 0.0
    %494 = vmatpush1.msra.mxu0 0.0
    %495 = vmatprep.subr.mxu0 0.0
    %496 = vmatpush1.msra.mxu0 0.0
    %497 = vmatprep.subr.mxu0 0.0
    %498 = vmatpush1.msra.mxu0 0.0
    %499 = vmatprep.subr.mxu0 0.0
    %500 = vmatpush1.msra.mxu0 0.0
    %501 = vmatprep.subr.mxu0 0.0
    %502 = vmatpush1.msra.mxu0 0.0
    %503 = vmatprep.subr.mxu0 0.0
    %504 = vmatpush1.msra.mxu0 0.0
    %505 = vmatprep.subr.mxu0 0.0
    %506 = vmatpush1.msra.mxu0 0.0
    %507 = vmatprep.subr.mxu0 0.0
    %508 = vmatpush1.msra.mxu0 0.0
    %509 = vmatprep.subr.mxu0 0.0
    %510 = vmatpush1.msra.mxu0 0.0
    %511 = vmatprep.subr.mxu0 0.0
    %512 = vmatpush1.msra.mxu0 0.0
    %513 = vmatprep.subr.mxu0 0.0
    %514 = vmatpush1.msra.mxu0 0.0
    %515 = vmatprep.subr.mxu0 0.0
    %516 = vmatpush1.msra.mxu0 0.0
    %517 = vmatprep.subr.mxu0 0.0
    %518 = vmatpush1.msra.mxu0 0.0
    %519 = vmatprep.mubr.f32.mxu0 0.0
    %520 = vmatmul.mubr.f32.gmra.mrb[0].mxu0 %v449
    %v521 = vpop.f32.mrb[0].mxu0
    %v522 = vadd.f32 %v445, %v521
    %v523 = vpop.f32.mrb[0].mxu0
    %524 = vdwg.mxu0
    %525 = vst [vmem:[#allocation2] sm:$0x7] %v522
    // Predicated region
    $region30: #{tpu_custom_call.1} parent=1 // pred_check
      _
    $region31: #{tpu_custom_call.1} parent=1 // pred_check_branch
      %527 = sbr.rel (0) target = $region33
    $region32: #{tpu_custom_call.1} parent=1 // pred_region
      %s529 = ssub.s32 64, 64
      %530 = vsyncadd [#allocation3], %s529
      %s532 = sshll.u32 [#allocation2], 4
      %s533 = int_to_ptr.vmem [resolvable:$true] %s532
      %535 = dma.vmem_to_hbm [thread:$0]  %s533, 64, %s7, [#allocation3]
    $region33: #{tpu_custom_call.1} parent=1 // pred_fallthru
      _
    // Predicated region
    $region34: #{tpu_custom_call.1} parent=1 // pred_check
      _
    $region35: #{tpu_custom_call.1} parent=1 // pred_check_branch
      %537 = sbr.rel (0) target = $region37
    $region36: #{tpu_custom_call.1} parent=1 // pred_region
      %538 = dma.done [#allocation3], 64
    $region37: #{tpu_custom_call.1} parent=1 // pred_fallthru
      _
    %539 = vsyncpa [#allocation3], 1

</llo_original>
